<compile_context>
chip_gen: v5e
topology: v5e:2x2
jax: 0.10.0
libtpu: 0.0.40
codegen_flags: <defaults>
</compile_context>

<pallas_src>
import jax
import jax.numpy as jnp
from jax.experimental import pallas as pl
from jax.experimental.pallas import tpu as pltpu

N_PAD = 128     # lane-dense padded output width (avoids masked vst partial stores)
TB_MAX = 1024   # max batch rows per grid step (~1.5 MB/step footprint)


def dqn_kernel(x_ref, w1_ref, b1_ref, w2_ref, b2_ref, w3_ref, b3_ref, o_ref):
    x = x_ref[...]            # (TB, K)  f32
    w1 = w1_ref[...]          # (K, 64)

    # ---- layer1: K is tiny (3) -> unrolled VPU broadcast-FMAs, skip the MXU ----
    h1 = b1_ref[...]          # (1, 64) broadcasts against (TB, 64)
    k_dim = x.shape[1]
    for k in range(k_dim):    # static unroll (K known at trace time)
        h1 = h1 + x[:, k:k + 1] * w1[k:k + 1, :]
    h1 = jnp.maximum(h1, 0.0)                          # (TB, 64)

    # ---- layer2 (MXU) + relu ----
    h2 = jnp.dot(h1, w2_ref[...], preferred_element_type=jnp.float32) + b2_ref[...]
    h2 = jnp.maximum(h2, 0.0)                          # (TB, 32)

    # ---- layer3 (MXU), lane-dense padded output (TB, 128) ----
    o_ref[...] = (jnp.dot(h2, w3_ref[...], preferred_element_type=jnp.float32)
                  + b3_ref[...]).astype(o_ref.dtype)


def pad_params(params):
    """Pre-pad layer3 weights/bias to the lane-dense output width.

    Do this ONCE at init / target-network-sync time so the per-call forward
    emits no pad ops.
    """
    w1, b1, w2, b2, w3, b3 = params
    n_actions = w3.shape[1]
    w3p = jnp.pad(w3, ((0, 0), (0, N_PAD - n_actions)))
    b3p = jnp.pad(b3, ((0, 0), (0, N_PAD - n_actions)))
    return (w1, b1, w2, b2, w3p, b3p)


def _batch_tiling(B):
    """Pick (tile_rows, num_tiles): a single grid step whenever it fits."""
    B8 = ((B + 7) // 8) * 8          # sublane alignment
    if B8 <= TB_MAX:
        return B8, 1                 # overhead-bound regime: one step, no pipeline
    num_tiles = pl.cdiv(B8, TB_MAX)
    return TB_MAX, num_tiles


def dqn_forward_padded(x, padded_params):
    """Hot-path forward: returns the padded (B_pad, N_PAD) Q-value slab.

    Consumers should argmax / gather directly on the slab (padded action columns
    are produced from zero weights+bias and padded batch rows from zero inputs).
    """
    w1, b1, w2, b2, w3p, b3p = padded_params
    B, K = x.shape

    tb, num_tiles = _batch_tiling(B)
    B_pad = tb * num_tiles
    if B_pad != B:                   # static shape check -> no op when aligned
        x = jnp.pad(x, ((0, B_pad - B), (0, 0)))

    # Weights/biases: full block, constant index_map -> VMEM-resident across steps.
    def resident(a):
        return pl.BlockSpec(a.shape, lambda i: (0,) * a.ndim)

    sem = ("arbitrary",) if num_tiles == 1 else ("parallel",)
    # TODO(synk): for very large replay batches on v7x, use pltpu.CORE_PARALLEL /
    # pl.core_map to shard grid steps across the 2 TensorCores.

    out = pl.pallas_call(
        dqn_kernel,
        out_shape=jax.ShapeDtypeStruct((B_pad, N_PAD), jnp.float32),
        grid=(num_tiles,),
        in_specs=[
            pl.BlockSpec((tb, K), lambda i: (i, 0)),     # x: tiled over batch
            resident(w1), resident(b1),
            resident(w2), resident(b2),
            resident(w3p), resident(b3p),
        ],
        out_specs=pl.BlockSpec((tb, N_PAD), lambda i: (i, 0)),
        compiler_params=pltpu.CompilerParams(dimension_semantics=sem),
    )(x, w1, b1, w2, b2, w3p, b3p)
    return out


def dqn_forward(x, padded_params, n_actions):
    """Convenience wrapper matching the PyTorch module's output shape."""
    out = dqn_forward_padded(x, padded_params)
    return out[:x.shape[0], :n_actions]


def init_params(key, n_observations, n_actions):
    # Deterministic init mimicking nn.Linear's U(-1/sqrt(fan_in), 1/sqrt(fan_in)).
    # Weights stored transposed vs. PyTorch ([in, out]) so the kernel computes
    # y = x @ W + b.
    def linear(key, fan_in, fan_out):
        kw, kb = jax.random.split(key)
        bound = 1.0 / jnp.sqrt(fan_in)
        w = jax.random.uniform(kw, (fan_in, fan_out), jnp.float32, -bound, bound)
        b = jax.random.uniform(kb, (1, fan_out), jnp.float32, -bound, bound)
        return w, b

    k1, k2, k3 = jax.random.split(key, 3)
    w1, b1 = linear(k1, n_observations, 64)
    w2, b2 = linear(k2, 64, 32)
    w3, b3 = linear(k3, 32, n_actions)
    return (w1, b1, w2, b2, w3, b3)


def reference_forward(x, params):
    w1, b1, w2, b2, w3, b3 = params
    h1 = jax.nn.relu(x @ w1 + b1)
    h2 = jax.nn.relu(h1 @ w2 + b2)
    return h2 @ w3 + b3


if __name__ == "__main__":
    n_observations = 3   # Pendulum obs (cos theta, sin theta, theta_dot)
    n_actions = 5        # discretized action space
    batch = 256          # replay-batch sized; runs as a single grid step

    key = jax.random.PRNGKey(0)
    kp, kx = jax.random.split(key)
    params = init_params(kp, n_observations, n_actions)
    padded_params = pad_params(params)   # done once (init / target-net sync)
    x = jax.random.normal(kx, (batch, n_observations), jnp.float32)

    slab = dqn_forward_padded(x, padded_params)      # hot-path padded slab
    slab = jax.block_until_ready(slab)
    out = slab[:batch, :n_actions]                   # convenience slice for check

    ref = reference_forward(x, params)
    assert slab.shape == (batch, N_PAD)
    assert out.shape == (batch, n_actions)
    assert jnp.allclose(out, ref, atol=1e-5, rtol=1e-5), "mismatch vs reference"
    # Padded action columns must be exactly zero-weight/zero-bias outputs.
    assert jnp.allclose(slab[:, n_actions:], 0.0), "padded columns not inert"

    # TODO(synk): for a full DQN training step, fuse the target-network forward,
    # Q(s,a) gather, argmax and TD-error into this same pallas_call (reusing the
    # resident-weight BlockSpec pattern) to amortize the fixed launch overhead.
    print("KERNEL_OK")
</pallas_src>

<mosaic_0001>
module attributes {stable_mosaic.version = 11 : i64} {
  func.func @dqn_kernel(%arg0: i32, %arg1: memref<256x3xf32, #tpu.memory_space<vmem>>, %arg2: memref<3x64xf32, #tpu.memory_space<vmem>>, %arg3: memref<1x64xf32, #tpu.memory_space<vmem>>, %arg4: memref<64x32xf32, #tpu.memory_space<vmem>>, %arg5: memref<1x32xf32, #tpu.memory_space<vmem>>, %arg6: memref<32x128xf32, #tpu.memory_space<vmem>>, %arg7: memref<1x128xf32, #tpu.memory_space<vmem>>, %arg8: memref<256x128xf32, #tpu.memory_space<vmem>>) attributes {dimension_semantics = [#tpu.dimension_semantics<arbitrary>], iteration_bounds = array<i64: 1>, scalar_prefetch = 0 : i64, scratch_operands = 0 : i64, tpu.core_type = #tpu.core_type<tc>, window_params = [{transform_indices = @transform_0, window_bounds = array<i64: 256, 3>}, {pipeline_mode = #tpu.pipeline_mode<synchronous>, transform_indices = @transform_1, window_bounds = array<i64: 3, 64>}, {pipeline_mode = #tpu.pipeline_mode<synchronous>, transform_indices = @transform_2, window_bounds = array<i64: 1, 64>}, {pipeline_mode = #tpu.pipeline_mode<synchronous>, transform_indices = @transform_3, window_bounds = array<i64: 64, 32>}, {pipeline_mode = #tpu.pipeline_mode<synchronous>, transform_indices = @transform_4, window_bounds = array<i64: 1, 32>}, {pipeline_mode = #tpu.pipeline_mode<synchronous>, transform_indices = @transform_5, window_bounds = array<i64: 32, 128>}, {pipeline_mode = #tpu.pipeline_mode<synchronous>, transform_indices = @transform_6, window_bounds = array<i64: 1, 128>}, {transform_indices = @transform_7, window_bounds = array<i64: 256, 128>}]} {
    %c0 = arith.constant 0 : index
    %c0_0 = arith.constant 0 : index
    %0 = vector.load %arg1[%c0, %c0_0] : memref<256x3xf32, #tpu.memory_space<vmem>>, vector<256x3xf32>
    %c0_1 = arith.constant 0 : index
    %c0_2 = arith.constant 0 : index
    %1 = vector.load %arg2[%c0_1, %c0_2] : memref<3x64xf32, #tpu.memory_space<vmem>>, vector<3x64xf32>
    %c0_3 = arith.constant 0 : index
    %c0_4 = arith.constant 0 : index
    %2 = vector.load %arg3[%c0_3, %c0_4] : memref<1x64xf32, #tpu.memory_space<vmem>>, vector<1x64xf32>
    %3 = vector.extract_strided_slice %0 {offsets = [0, 0], sizes = [256, 1], strides = [1, 1]} : vector<256x3xf32> to vector<256x1xf32>
    %4 = vector.extract_strided_slice %1 {offsets = [0, 0], sizes = [1, 64], strides = [1, 1]} : vector<3x64xf32> to vector<1x64xf32>
    %5 = vector.broadcast %3 : vector<256x1xf32> to vector<256x64xf32>
    %6 = vector.broadcast %4 : vector<1x64xf32> to vector<256x64xf32>
    %7 = arith.mulf %5, %6 : vector<256x64xf32>
    %8 = vector.broadcast %2 : vector<1x64xf32> to vector<256x64xf32>
    %9 = arith.addf %8, %7 : vector<256x64xf32>
    %10 = vector.extract_strided_slice %0 {offsets = [0, 1], sizes = [256, 1], strides = [1, 1]} : vector<256x3xf32> to vector<256x1xf32>
    %11 = vector.extract_strided_slice %1 {offsets = [1, 0], sizes = [1, 64], strides = [1, 1]} : vector<3x64xf32> to vector<1x64xf32>
    %12 = vector.broadcast %10 : vector<256x1xf32> to vector<256x64xf32>
    %13 = vector.broadcast %11 : vector<1x64xf32> to vector<256x64xf32>
    %14 = arith.mulf %12, %13 : vector<256x64xf32>
    %15 = arith.addf %9, %14 : vector<256x64xf32>
    %16 = vector.extract_strided_slice %0 {offsets = [0, 2], sizes = [256, 1], strides = [1, 1]} : vector<256x3xf32> to vector<256x1xf32>
    %17 = vector.extract_strided_slice %1 {offsets = [2, 0], sizes = [1, 64], strides = [1, 1]} : vector<3x64xf32> to vector<1x64xf32>
    %18 = vector.broadcast %16 : vector<256x1xf32> to vector<256x64xf32>
    %19 = vector.broadcast %17 : vector<1x64xf32> to vector<256x64xf32>
    %20 = arith.mulf %18, %19 : vector<256x64xf32>
    %21 = arith.addf %15, %20 : vector<256x64xf32>
    %cst = arith.constant 0.000000e+00 : f32
    %22 = vector.broadcast %cst : f32 to vector<256x64xf32>
    %23 = arith.maximumf %21, %22 : vector<256x64xf32>
    %c0_5 = arith.constant 0 : index
    %c0_6 = arith.constant 0 : index
    %24 = vector.load %arg4[%c0_5, %c0_6] : memref<64x32xf32, #tpu.memory_space<vmem>>, vector<64x32xf32>
    %cst_7 = arith.constant dense<0.000000e+00> : vector<256x32xf32>
    %25 = tpu.matmul %23, %24, %cst_7 {dimension_numbers = #tpu.dot_dimension_numbers<[1], [0], [0], [1], [0, 0, 1, 1], [], []>} : vector<256x64xf32>, vector<64x32xf32>, vector<256x32xf32> -> vector<256x32xf32>
    %c0_8 = arith.constant 0 : index
    %c0_9 = arith.constant 0 : index
    %26 = vector.load %arg5[%c0_8, %c0_9] : memref<1x32xf32, #tpu.memory_space<vmem>>, vector<1x32xf32>
    %27 = vector.broadcast %26 : vector<1x32xf32> to vector<256x32xf32>
    %28 = arith.addf %25, %27 : vector<256x32xf32>
    %cst_10 = arith.constant 0.000000e+00 : f32
    %29 = vector.broadcast %cst_10 : f32 to vector<256x32xf32>
    %30 = arith.maximumf %28, %29 : vector<256x32xf32>
    %c0_11 = arith.constant 0 : index
    %c0_12 = arith.constant 0 : index
    %31 = vector.load %arg6[%c0_11, %c0_12] : memref<32x128xf32, #tpu.memory_space<vmem>>, vector<32x128xf32>
    %cst_13 = arith.constant dense<0.000000e+00> : vector<256x128xf32>
    %32 = tpu.matmul %30, %31, %cst_13 {dimension_numbers = #tpu.dot_dimension_numbers<[1], [0], [0], [1], [0, 0, 1, 1], [], []>} : vector<256x32xf32>, vector<32x128xf32>, vector<256x128xf32> -> vector<256x128xf32>
    %c0_14 = arith.constant 0 : index
    %c0_15 = arith.constant 0 : index
    %33 = vector.load %arg7[%c0_14, %c0_15] : memref<1x128xf32, #tpu.memory_space<vmem>>, vector<1x128xf32>
    %34 = vector.broadcast %33 : vector<1x128xf32> to vector<256x128xf32>
    %35 = arith.addf %32, %34 : vector<256x128xf32>
    %c0_16 = arith.constant 0 : index
    %c0_17 = arith.constant 0 : index
    %36 = vector.load %arg8[%c0_16, %c0_17] : memref<256x128xf32, #tpu.memory_space<vmem>>, vector<256x128xf32>
    tpu.vector_store %arg8[%c0_16, %c0_17], %35 {strides = array<i32>} : memref<256x128xf32, #tpu.memory_space<vmem>>, vector<256x128xf32>,
    return
  }
  func.func @transform_0(%arg0: i32) -> (i32, i32) {
    %c0_i32 = arith.constant 0 : i32
    %c0_i32_0 = arith.constant 0 : i32
    return %arg0, %c0_i32 : i32, i32
  }
  func.func @transform_1(%arg0: i32) -> (i32, i32) {
    %c0_i32 = arith.constant 0 : i32
    %c0_i32_0 = arith.constant 0 : i32
    %c0_i32_1 = arith.constant 0 : i32
    return %c0_i32, %c0_i32_0 : i32, i32
  }
  func.func @transform_2(%arg0: i32) -> (i32, i32) {
    %c0_i32 = arith.constant 0 : i32
    %c0_i32_0 = arith.constant 0 : i32
    %c0_i32_1 = arith.constant 0 : i32
    return %c0_i32, %c0_i32_0 : i32, i32
  }
  func.func @transform_3(%arg0: i32) -> (i32, i32) {
    %c0_i32 = arith.constant 0 : i32
    %c0_i32_0 = arith.constant 0 : i32
    %c0_i32_1 = arith.constant 0 : i32
    return %c0_i32, %c0_i32_0 : i32, i32
  }
  func.func @transform_4(%arg0: i32) -> (i32, i32) {
    %c0_i32 = arith.constant 0 : i32
    %c0_i32_0 = arith.constant 0 : i32
    %c0_i32_1 = arith.constant 0 : i32
    return %c0_i32, %c0_i32_0 : i32, i32
  }
  func.func @transform_5(%arg0: i32) -> (i32, i32) {
    %c0_i32 = arith.constant 0 : i32
    %c0_i32_0 = arith.constant 0 : i32
    %c0_i32_1 = arith.constant 0 : i32
    return %c0_i32, %c0_i32_0 : i32, i32
  }
  func.func @transform_6(%arg0: i32) -> (i32, i32) {
    %c0_i32 = arith.constant 0 : i32
    %c0_i32_0 = arith.constant 0 : i32
    %c0_i32_1 = arith.constant 0 : i32
    return %c0_i32, %c0_i32_0 : i32, i32
  }
  func.func @transform_7(%arg0: i32) -> (i32, i32) {
    %c0_i32 = arith.constant 0 : i32
    %c0_i32_0 = arith.constant 0 : i32
    return %arg0, %c0_i32 : i32, i32
  }
}

</mosaic_0001>

<llo_original>
// kernel: tpu_custom_call.1
$region0: #{tpu_custom_call.1}
  #allocation0 [shape = 'u32[]', space=smem, size = 0x4, offset = 0x4, fixed_abs, tag = 'smem constant byte address 0x4 - core index']
  #allocation1 [shape = 'u32[72,128]{1,0:T(1,128)}', space=vmem, size = 0x9000, scoped, tag = 'internal scratch']
  %s0 = inlined_call_operand.vmem [shape: f32[256,3], index: 0, kind: input, shape index: {}]
  %s1 = inlined_call_operand.vmem [shape: f32[3,64], index: 1, kind: input, shape index: {}]
  %s2 = inlined_call_operand.vmem [shape: f32[1,64], index: 2, kind: input, shape index: {}]
  %s3 = inlined_call_operand.vmem [shape: f32[64,32], index: 3, kind: input, shape index: {}]
  %s4 = inlined_call_operand.vmem [shape: f32[1,32], index: 4, kind: input, shape index: {}]
  %s5 = inlined_call_operand.vmem [shape: f32[32,128], index: 5, kind: input, shape index: {}]
  %s6 = inlined_call_operand.vmem [shape: f32[1,128], index: 6, kind: input, shape index: {}]
  %s7 = inlined_call_operand.hbm [shape: f32[256,128], index: 7, kind: output, shape index: {}]
  %s8 = sld [smem:[#allocation0]]
  $region38: #{tpu_custom_call.1} parent=0
    _
  %s10 = ssub.s32 1, %s8
  %s11 = scalar_select 0, %s10, %s8
  $region1: #{tpu_custom_call.1} parent=0
    #allocation2 [shape = 'u8[131072]{0}', space=vmem, size = 0x20000, scoped, tag = 'output window, operand 0, single buffered']
    #allocation3 [shape = 's32[1]{0}', space=sflag, size = 0x4, scoped, tag = 'scoped memory for tpu_custom_call.1']
    %12 = vsyncpa [#allocation3], 0
    // Predicated region
    $region2: #{tpu_custom_call.1} parent=1 // pred_check
      _
    $region3: #{tpu_custom_call.1} parent=1 // pred_check_branch
      %14 = sbr.rel (0) target = $region5
    $region4: #{tpu_custom_call.1} parent=1 // pred_region
      _
    $region5: #{tpu_custom_call.1} parent=1 // pred_fallthru
      _
    // Predicated region
    $region6: #{tpu_custom_call.1} parent=1 // pred_check
      _
    $region7: #{tpu_custom_call.1} parent=1 // pred_check_branch
      %16 = sbr.rel (0) target = $region9
    $region8: #{tpu_custom_call.1} parent=1 // pred_region
      _
    $region9: #{tpu_custom_call.1} parent=1 // pred_fallthru
      _
    // Predicated region
    $region10: #{tpu_custom_call.1} parent=1 // pred_check
      _
    $region11: #{tpu_custom_call.1} parent=1 // pred_check_branch
      %18 = sbr.rel (0) target = $region13
    $region12: #{tpu_custom_call.1} parent=1 // pred_region
      _
    $region13: #{tpu_custom_call.1} parent=1 // pred_fallthru
      _
    // Predicated region
    $region14: #{tpu_custom_call.1} parent=1 // pred_check
      _
    $region15: #{tpu_custom_call.1} parent=1 // pred_check_branch
      %20 = sbr.rel (0) target = $region17
    $region16: #{tpu_custom_call.1} parent=1 // pred_region
      _
    $region17: #{tpu_custom_call.1} parent=1 // pred_fallthru
      _
    // Predicated region
    $region18: #{tpu_custom_call.1} parent=1 // pred_check
      _
    $region19: #{tpu_custom_call.1} parent=1 // pred_check_branch
      %22 = sbr.rel (0) target = $region21
    $region20: #{tpu_custom_call.1} parent=1 // pred_region
      _
    $region21: #{tpu_custom_call.1} parent=1 // pred_fallthru
      _
    // Predicated region
    $region22: #{tpu_custom_call.1} parent=1 // pred_check
      _
    $region23: #{tpu_custom_call.1} parent=1 // pred_check_branch
      %24 = sbr.rel (0) target = $region25
    $region24: #{tpu_custom_call.1} parent=1 // pred_region
      _
    $region25: #{tpu_custom_call.1} parent=1 // pred_fallthru
      _
    // Predicated region
    $region26: #{tpu_custom_call.1} parent=1 // pred_check
      _
    $region27: #{tpu_custom_call.1} parent=1 // pred_check_branch
      %26 = sbr.rel (0) target = $region29
    $region28: #{tpu_custom_call.1} parent=1 // pred_region
      _
    $region29: #{tpu_custom_call.1} parent=1 // pred_fallthru
      _
    %v27 = vld [vmem:[%s0] sm:$0xff]
    %v28 = vld [vmem:[%s0 + $0x8] sm:$0xff]
    %v29 = vld [vmem:[%s0 + $0x10] sm:$0xff]
    %v30 = vld [vmem:[%s0 + $0x18] sm:$0xff]
    %v31 = vld [vmem:[%s0 + $0x20] sm:$0xff]
    %v32 = vld [vmem:[%s0 + $0x28] sm:$0xff]
    %v33 = vld [vmem:[%s0 + $0x30] sm:$0xff]
    %v34 = vld [vmem:[%s0 + $0x38] sm:$0xff]
    %v35 = vld [vmem:[%s0 + $0x40] sm:$0xff]
    %v36 = vld [vmem:[%s0 + $0x48] sm:$0xff]
    %v37 = vld [vmem:[%s0 + $0x50] sm:$0xff]
    %v38 = vld [vmem:[%s0 + $0x58] sm:$0xff]
    %v39 = vld [vmem:[%s0 + $0x60] sm:$0xff]
    %v40 = vld [vmem:[%s0 + $0x68] sm:$0xff]
    %v41 = vld [vmem:[%s0 + $0x70] sm:$0xff]
    %v42 = vld [vmem:[%s0 + $0x78] sm:$0xff]
    %v43 = vld [vmem:[%s0 + $0x80] sm:$0xff]
    %v44 = vld [vmem:[%s0 + $0x88] sm:$0xff]
    %v45 = vld [vmem:[%s0 + $0x90] sm:$0xff]
    %v46 = vld [vmem:[%s0 + $0x98] sm:$0xff]
    %v47 = vld [vmem:[%s0 + $0xa0] sm:$0xff]
    %v48 = vld [vmem:[%s0 + $0xa8] sm:$0xff]
    %v49 = vld [vmem:[%s0 + $0xb0] sm:$0xff]
    %v50 = vld [vmem:[%s0 + $0xb8] sm:$0xff]
    %v51 = vld [vmem:[%s0 + $0xc0] sm:$0xff]
    %v52 = vld [vmem:[%s0 + $0xc8] sm:$0xff]
    %v53 = vld [vmem:[%s0 + $0xd0] sm:$0xff]
    %v54 = vld [vmem:[%s0 + $0xd8] sm:$0xff]
    %v55 = vld [vmem:[%s0 + $0xe0] sm:$0xff]
    %v56 = vld [vmem:[%s0 + $0xe8] sm:$0xff]
    %v57 = vld [vmem:[%s0 + $0xf0] sm:$0xff]
    %v58 = vld [vmem:[%s0 + $0xf8] sm:$0xff]
    %v59 = vld [vmem:[%s1] sm:$0x7]
    %v60 = vld [vmem:[%s2] sm:$0x1]
    %62 = vset.pattern.permute.xlu0 0
    %63 = vperm.xlu0 %62, %v27
    %v64 = vpop.permute.xlu0 %63
    %67 = vset.pattern.permute.xlu0 0
    %68 = vperm.xlu0 %67, %v28
    %v69 = vpop.permute.xlu0 %68
    %72 = vset.pattern.permute.xlu0 0
    %73 = vperm.xlu0 %72, %v29
    %v74 = vpop.permute.xlu0 %73
    %77 = vset.pattern.permute.xlu0 0
    %78 = vperm.xlu0 %77, %v30
    %v79 = vpop.permute.xlu0 %78
    %82 = vset.pattern.permute.xlu0 0
    %83 = vperm.xlu0 %82, %v31
    %v84 = vpop.permute.xlu0 %83
    %87 = vset.pattern.permute.xlu0 0
    %88 = vperm.xlu0 %87, %v32
    %v89 = vpop.permute.xlu0 %88
    %92 = vset.pattern.permute.xlu0 0
    %93 = vperm.xlu0 %92, %v33
    %v94 = vpop.permute.xlu0 %93
    %97 = vset.pattern.permute.xlu0 0
    %98 = vperm.xlu0 %97, %v34
    %v99 = vpop.permute.xlu0 %98
    %102 = vset.pattern.permute.xlu0 0
    %103 = vperm.xlu0 %102, %v35
    %v104 = vpop.permute.xlu0 %103
    %107 = vset.pattern.permute.xlu0 0
    %108 = vperm.xlu0 %107, %v36
    %v109 = vpop.permute.xlu0 %108
    %112 = vset.pattern.permute.xlu0 0
    %113 = vperm.xlu0 %112, %v37
    %v114 = vpop.permute.xlu0 %113
    %117 = vset.pattern.permute.xlu0 0
    %118 = vperm.xlu0 %117, %v38
    %v119 = vpop.permute.xlu0 %118
    %122 = vset.pattern.permute.xlu0 0
    %123 = vperm.xlu0 %122, %v39
    %v124 = vpop.permute.xlu0 %123
    %127 = vset.pattern.permute.xlu0 0
    %128 = vperm.xlu0 %127, %v40
    %v129 = vpop.permute.xlu0 %128
    %132 = vset.pattern.permute.xlu0 0
    %133 = vperm.xlu0 %132, %v41
    %v134 = vpop.permute.xlu0 %133
    %137 = vset.pattern.permute.xlu0 0
    %138 = vperm.xlu0 %137, %v42
    %v139 = vpop.permute.xlu0 %138
    %142 = vset.pattern.permute.xlu0 0
    %143 = vperm.xlu0 %142, %v43
    %v144 = vpop.permute.xlu0 %143
    %147 = vset.pattern.permute.xlu0 0
    %148 = vperm.xlu0 %147, %v44
    %v149 = vpop.permute.xlu0 %148
    %152 = vset.pattern.permute.xlu0 0
    %153 = vperm.xlu0 %152, %v45
    %v154 = vpop.permute.xlu0 %153
    %157 = vset.pattern.permute.xlu0 0
    %158 = vperm.xlu0 %157, %v46
    %v159 = vpop.permute.xlu0 %158
    %162 = vset.pattern.permute.xlu0 0
    %163 = vperm.xlu0 %162, %v47
    %v164 = vpop.permute.xlu0 %163
    %167 = vset.pattern.permute.xlu0 0
    %168 = vperm.xlu0 %167, %v48
    %v169 = vpop.permute.xlu0 %168
    %172 = vset.pattern.permute.xlu0 0
    %173 = vperm.xlu0 %172, %v49
    %v174 = vpop.permute.xlu0 %173
    %177 = vset.pattern.permute.xlu0 0
    %178 = vperm.xlu0 %177, %v50
    %v179 = vpop.permute.xlu0 %178
    %182 = vset.pattern.permute.xlu0 0
    %183 = vperm.xlu0 %182, %v51
    %v184 = vpop.permute.xlu0 %183
    %187 = vset.pattern.permute.xlu0 0
    %188 = vperm.xlu0 %187, %v52
    %v189 = vpop.permute.xlu0 %188
    %192 = vset.pattern.permute.xlu0 0
    %193 = vperm.xlu0 %192, %v53
    %v194 = vpop.permute.xlu0 %193
    %197 = vset.pattern.permute.xlu0 0
    %198 = vperm.xlu0 %197, %v54
    %v199 = vpop.permute.xlu0 %198
    %202 = vset.pattern.permute.xlu0 0
    %203 = vperm.xlu0 %202, %v55
    %v204 = vpop.permute.xlu0 %203
    %207 = vset.pattern.permute.xlu0 0
    %208 = vperm.xlu0 %207, %v56
    %v209 = vpop.permute.xlu0 %208
    %212 = vset.pattern.permute.xlu0 0
    %213 = vperm.xlu0 %212, %v57
    %v214 = vpop.permute.xlu0 %213
    %217 = vset.pattern.permute.xlu0 0
    %218 = vperm.xlu0 %217, %v58
    %v219 = vpop.permute.xlu0 %218
    %v221 = vperm.slane %v59, 0
    %v222 = vmul.f32 %v64, %v221
    %v223 = vmul.f32 %v69, %v221
    %v224 = vmul.f32 %v74, %v221
    %v225 = vmul.f32 %v79, %v221
    %v226 = vmul.f32 %v84, %v221
    %v227 = vmul.f32 %v89, %v221
    %v228 = vmul.f32 %v94, %v221
    %v229 = vmul.f32 %v99, %v221
    %v230 = vmul.f32 %v104, %v221
    %v231 = vmul.f32 %v109, %v221
    %v232 = vmul.f32 %v114, %v221
    %v233 = vmul.f32 %v119, %v221
    %v234 = vmul.f32 %v124, %v221
    %v235 = vmul.f32 %v129, %v221
    %v236 = vmul.f32 %v134, %v221
    %v237 = vmul.f32 %v139, %v221
    %v238 = vmul.f32 %v144, %v221
    %v239 = vmul.f32 %v149, %v221
    %v240 = vmul.f32 %v154, %v221
    %v241 = vmul.f32 %v159, %v221
    %v242 = vmul.f32 %v164, %v221
    %v243 = vmul.f32 %v169, %v221
    %v244 = vmul.f32 %v174, %v221
    %v245 = vmul.f32 %v179, %v221
    %v246 = vmul.f32 %v184, %v221
    %v247 = vmul.f32 %v189, %v221
    %v248 = vmul.f32 %v194, %v221
    %v249 = vmul.f32 %v199, %v221
    %v250 = vmul.f32 %v204, %v221
    %v251 = vmul.f32 %v209, %v221
    %v252 = vmul.f32 %v214, %v221
    %v253 = vmul.f32 %v219, %v221
    %v255 = vperm.slane %v60, 0
    %v257 = vadd.f32 %v255, %v222
    %v258 = vadd.f32 %v255, %v223
    %v259 = vadd.f32 %v255, %v224
    %v260 = vadd.f32 %v255, %v225
    %v261 = vadd.f32 %v255, %v226
    %v262 = vadd.f32 %v255, %v227
    %v263 = vadd.f32 %v255, %v228
    %v264 = vadd.f32 %v255, %v229
    %v265 = vadd.f32 %v255, %v230
    %v266 = vadd.f32 %v255, %v231
    %v267 = vadd.f32 %v255, %v232
    %v268 = vadd.f32 %v255, %v233
    %v269 = vadd.f32 %v255, %v234
    %v270 = vadd.f32 %v255, %v235
    %v271 = vadd.f32 %v255, %v236
    %v272 = vadd.f32 %v255, %v237
    %v273 = vadd.f32 %v255, %v238
    %v274 = vadd.f32 %v255, %v239
    %v275 = vadd.f32 %v255, %v240
    %v276 = vadd.f32 %v255, %v241
    %v277 = vadd.f32 %v255, %v242
    %v278 = vadd.f32 %v255, %v243
    %v279 = vadd.f32 %v255, %v244
    %v280 = vadd.f32 %v255, %v245
    %v281 = vadd.f32 %v255, %v246
    %v282 = vadd.f32 %v255, %v247
    %v283 = vadd.f32 %v255, %v248
    %v284 = vadd.f32 %v255, %v249
    %v285 = vadd.f32 %v255, %v250
    %v286 = vadd.f32 %v255, %v251
    %v287 = vadd.f32 %v255, %v252
    %v288 = vadd.f32 %v255, %v253
    %289 = vset.pattern.permute.xlu0 1
    %290 = vperm.xlu0 %289, %v27
    %v291 = vpop.permute.xlu0 %290
    %293 = vset.pattern.permute.xlu0 1
    %294 = vperm.xlu0 %293, %v28
    %v295 = vpop.permute.xlu0 %294
    %297 = vset.pattern.permute.xlu0 1
    %298 = vperm.xlu0 %297, %v29
    %v299 = vpop.permute.xlu0 %298
    %301 = vset.pattern.permute.xlu0 1
    %302 = vperm.xlu0 %301, %v30
    %v303 = vpop.permute.xlu0 %302
    %305 = vset.pattern.permute.xlu0 1
    %306 = vperm.xlu0 %305, %v31
    %v307 = vpop.permute.xlu0 %306
    %309 = vset.pattern.permute.xlu0 1
    %310 = vperm.xlu0 %309, %v32
    %v311 = vpop.permute.xlu0 %310
    %313 = vset.pattern.permute.xlu0 1
    %314 = vperm.xlu0 %313, %v33
    %v315 = vpop.permute.xlu0 %314
    %317 = vset.pattern.permute.xlu0 1
    %318 = vperm.xlu0 %317, %v34
    %v319 = vpop.permute.xlu0 %318
    %321 = vset.pattern.permute.xlu0 1
    %322 = vperm.xlu0 %321, %v35
    %v323 = vpop.permute.xlu0 %322
    %325 = vset.pattern.permute.xlu0 1
    %326 = vperm.xlu0 %325, %v36
    %v327 = vpop.permute.xlu0 %326
    %329 = vset.pattern.permute.xlu0 1
    %330 = vperm.xlu0 %329, %v37
    %v331 = vpop.permute.xlu0 %330
    %333 = vset.pattern.permute.xlu0 1
    %334 = vperm.xlu0 %333, %v38
    %v335 = vpop.permute.xlu0 %334
    %337 = vset.pattern.permute.xlu0 1
    %338 = vperm.xlu0 %337, %v39
    %v339 = vpop.permute.xlu0 %338
    %341 = vset.pattern.permute.xlu0 1
    %342 = vperm.xlu0 %341, %v40
    %v343 = vpop.permute.xlu0 %342
    %345 = vset.pattern.permute.xlu0 1
    %346 = vperm.xlu0 %345, %v41
    %v347 = vpop.permute.xlu0 %346
    %349 = vset.pattern.permute.xlu0 1
    %350 = vperm.xlu0 %349, %v42
    %v351 = vpop.permute.xlu0 %350
    %353 = vset.pattern.permute.xlu0 1
    %354 = vperm.xlu0 %353, %v43
    %v355 = vpop.permute.xlu0 %354
    %357 = vset.pattern.permute.xlu0 1
    %358 = vperm.xlu0 %357, %v44
    %v359 = vpop.permute.xlu0 %358
    %361 = vset.pattern.permute.xlu0 1
    %362 = vperm.xlu0 %361, %v45
    %v363 = vpop.permute.xlu0 %362
    %365 = vset.pattern.permute.xlu0 1
    %366 = vperm.xlu0 %365, %v46
    %v367 = vpop.permute.xlu0 %366
    %369 = vset.pattern.permute.xlu0 1
    %370 = vperm.xlu0 %369, %v47
    %v371 = vpop.permute.xlu0 %370
    %373 = vset.pattern.permute.xlu0 1
    %374 = vperm.xlu0 %373, %v48
    %v375 = vpop.permute.xlu0 %374
    %377 = vset.pattern.permute.xlu0 1
    %378 = vperm.xlu0 %377, %v49
    %v379 = vpop.permute.xlu0 %378
    %381 = vset.pattern.permute.xlu0 1
    %382 = vperm.xlu0 %381, %v50
    %v383 = vpop.permute.xlu0 %382
    %385 = vset.pattern.permute.xlu0 1
    %386 = vperm.xlu0 %385, %v51
    %v387 = vpop.permute.xlu0 %386
    %389 = vset.pattern.permute.xlu0 1
    %390 = vperm.xlu0 %389, %v52
    %v391 = vpop.permute.xlu0 %390
    %393 = vset.pattern.permute.xlu0 1
    %394 = vperm.xlu0 %393, %v53
    %v395 = vpop.permute.xlu0 %394
    %397 = vset.pattern.permute.xlu0 1
    %398 = vperm.xlu0 %397, %v54
    %v399 = vpop.permute.xlu0 %398
    %401 = vset.pattern.permute.xlu0 1
    %402 = vperm.xlu0 %401, %v55
    %v403 = vpop.permute.xlu0 %402
    %405 = vset.pattern.permute.xlu0 1
    %406 = vperm.xlu0 %405, %v56
    %v407 = vpop.permute.xlu0 %406
    %409 = vset.pattern.permute.xlu0 1
    %410 = vperm.xlu0 %409, %v57
    %v411 = vpop.permute.xlu0 %410
    %413 = vset.pattern.permute.xlu0 1
    %414 = vperm.xlu0 %413, %v58
    %v415 = vpop.permute.xlu0 %414
    %v417 = vperm.slane %v59, 1
    %v418 = vmul.f32 %v291, %v417
    %v419 = vmul.f32 %v295, %v417
    %v420 = vmul.f32 %v299, %v417
    %v421 = vmul.f32 %v303, %v417
    %v422 = vmul.f32 %v307, %v417
    %v423 = vmul.f32 %v311, %v417
    %v424 = vmul.f32 %v315, %v417
    %v425 = vmul.f32 %v319, %v417
    %v426 = vmul.f32 %v323, %v417
    %v427 = vmul.f32 %v327, %v417
    %v428 = vmul.f32 %v331, %v417
    %v429 = vmul.f32 %v335, %v417
    %v430 = vmul.f32 %v339, %v417
    %v431 = vmul.f32 %v343, %v417
    %v432 = vmul.f32 %v347, %v417
    %v433 = vmul.f32 %v351, %v417
    %v434 = vmul.f32 %v355, %v417
    %v435 = vmul.f32 %v359, %v417
    %v436 = vmul.f32 %v363, %v417
    %v437 = vmul.f32 %v367, %v417
    %v438 = vmul.f32 %v371, %v417
    %v439 = vmul.f32 %v375, %v417
    %v440 = vmul.f32 %v379, %v417
    %v441 = vmul.f32 %v383, %v417
    %v442 = vmul.f32 %v387, %v417
    %v443 = vmul.f32 %v391, %v417
    %v444 = vmul.f32 %v395, %v417
    %v445 = vmul.f32 %v399, %v417
    %v446 = vmul.f32 %v403, %v417
    %v447 = vmul.f32 %v407, %v417
    %v448 = vmul.f32 %v411, %v417
    %v449 = vmul.f32 %v415, %v417
    %v450 = vadd.f32 %v257, %v418
    %v451 = vadd.f32 %v258, %v419
    %v452 = vadd.f32 %v259, %v420
    %v453 = vadd.f32 %v260, %v421
    %v454 = vadd.f32 %v261, %v422
    %v455 = vadd.f32 %v262, %v423
    %v456 = vadd.f32 %v263, %v424
    %v457 = vadd.f32 %v264, %v425
    %v458 = vadd.f32 %v265, %v426
    %v459 = vadd.f32 %v266, %v427
    %v460 = vadd.f32 %v267, %v428
    %v461 = vadd.f32 %v268, %v429
    %v462 = vadd.f32 %v269, %v430
    %v463 = vadd.f32 %v270, %v431
    %v464 = vadd.f32 %v271, %v432
    %v465 = vadd.f32 %v272, %v433
    %v466 = vadd.f32 %v273, %v434
    %v467 = vadd.f32 %v274, %v435
    %v468 = vadd.f32 %v275, %v436
    %v469 = vadd.f32 %v276, %v437
    %v470 = vadd.f32 %v277, %v438
    %v471 = vadd.f32 %v278, %v439
    %v472 = vadd.f32 %v279, %v440
    %v473 = vadd.f32 %v280, %v441
    %v474 = vadd.f32 %v281, %v442
    %v475 = vadd.f32 %v282, %v443
    %v476 = vadd.f32 %v283, %v444
    %v477 = vadd.f32 %v284, %v445
    %v478 = vadd.f32 %v285, %v446
    %v479 = vadd.f32 %v286, %v447
    %v480 = vadd.f32 %v287, %v448
    %v481 = vadd.f32 %v288, %v449
    %482 = vset.pattern.permute.xlu0 2
    %483 = vperm.xlu0 %482, %v27
    %v484 = vpop.permute.xlu0 %483
    %486 = vset.pattern.permute.xlu0 2
    %487 = vperm.xlu0 %486, %v28
    %v488 = vpop.permute.xlu0 %487
    %490 = vset.pattern.permute.xlu0 2
    %491 = vperm.xlu0 %490, %v29
    %v492 = vpop.permute.xlu0 %491
    %494 = vset.pattern.permute.xlu0 2
    %495 = vperm.xlu0 %494, %v30
    %v496 = vpop.permute.xlu0 %495
    %498 = vset.pattern.permute.xlu0 2
    %499 = vperm.xlu0 %498, %v31
    %v500 = vpop.permute.xlu0 %499
    %502 = vset.pattern.permute.xlu0 2
    %503 = vperm.xlu0 %502, %v32
    %v504 = vpop.permute.xlu0 %503
    %506 = vset.pattern.permute.xlu0 2
    %507 = vperm.xlu0 %506, %v33
    %v508 = vpop.permute.xlu0 %507
    %510 = vset.pattern.permute.xlu0 2
    %511 = vperm.xlu0 %510, %v34
    %v512 = vpop.permute.xlu0 %511
    %514 = vset.pattern.permute.xlu0 2
    %515 = vperm.xlu0 %514, %v35
    %v516 = vpop.permute.xlu0 %515
    %518 = vset.pattern.permute.xlu0 2
    %519 = vperm.xlu0 %518, %v36
    %v520 = vpop.permute.xlu0 %519
    %522 = vset.pattern.permute.xlu0 2
    %523 = vperm.xlu0 %522, %v37
    %v524 = vpop.permute.xlu0 %523
    %526 = vset.pattern.permute.xlu0 2
    %527 = vperm.xlu0 %526, %v38
    %v528 = vpop.permute.xlu0 %527
    %530 = vset.pattern.permute.xlu0 2
    %531 = vperm.xlu0 %530, %v39
    %v532 = vpop.permute.xlu0 %531
    %534 = vset.pattern.permute.xlu0 2
    %535 = vperm.xlu0 %534, %v40
    %v536 = vpop.permute.xlu0 %535
    %538 = vset.pattern.permute.xlu0 2
    %539 = vperm.xlu0 %538, %v41
    %v540 = vpop.permute.xlu0 %539
    %542 = vset.pattern.permute.xlu0 2
    %543 = vperm.xlu0 %542, %v42
    %v544 = vpop.permute.xlu0 %543
    %546 = vset.pattern.permute.xlu0 2
    %547 = vperm.xlu0 %546, %v43
    %v548 = vpop.permute.xlu0 %547
    %550 = vset.pattern.permute.xlu0 2
    %551 = vperm.xlu0 %550, %v44
    %v552 = vpop.permute.xlu0 %551
    %554 = vset.pattern.permute.xlu0 2
    %555 = vperm.xlu0 %554, %v45
    %v556 = vpop.permute.xlu0 %555
    %558 = vset.pattern.permute.xlu0 2
    %559 = vperm.xlu0 %558, %v46
    %v560 = vpop.permute.xlu0 %559
    %562 = vset.pattern.permute.xlu0 2
    %563 = vperm.xlu0 %562, %v47
    %v564 = vpop.permute.xlu0 %563
    %566 = vset.pattern.permute.xlu0 2
    %567 = vperm.xlu0 %566, %v48
    %v568 = vpop.permute.xlu0 %567
    %570 = vset.pattern.permute.xlu0 2
    %571 = vperm.xlu0 %570, %v49
    %v572 = vpop.permute.xlu0 %571
    %574 = vset.pattern.permute.xlu0 2
    %575 = vperm.xlu0 %574, %v50
    %v576 = vpop.permute.xlu0 %575
    %578 = vset.pattern.permute.xlu0 2
    %579 = vperm.xlu0 %578, %v51
    %v580 = vpop.permute.xlu0 %579
    %582 = vset.pattern.permute.xlu0 2
    %583 = vperm.xlu0 %582, %v52
    %v584 = vpop.permute.xlu0 %583
    %586 = vset.pattern.permute.xlu0 2
    %587 = vperm.xlu0 %586, %v53
    %v588 = vpop.permute.xlu0 %587
    %590 = vset.pattern.permute.xlu0 2
    %591 = vperm.xlu0 %590, %v54
    %v592 = vpop.permute.xlu0 %591
    %594 = vset.pattern.permute.xlu0 2
    %595 = vperm.xlu0 %594, %v55
    %v596 = vpop.permute.xlu0 %595
    %598 = vset.pattern.permute.xlu0 2
    %599 = vperm.xlu0 %598, %v56
    %v600 = vpop.permute.xlu0 %599
    %602 = vset.pattern.permute.xlu0 2
    %603 = vperm.xlu0 %602, %v57
    %v604 = vpop.permute.xlu0 %603
    %606 = vset.pattern.permute.xlu0 2
    %607 = vperm.xlu0 %606, %v58
    %v608 = vpop.permute.xlu0 %607
    %v610 = vperm.slane %v59, 2
    %v611 = vmul.f32 %v484, %v610
    %v612 = vmul.f32 %v488, %v610
    %v613 = vmul.f32 %v492, %v610
    %v614 = vmul.f32 %v496, %v610
    %v615 = vmul.f32 %v500, %v610
    %v616 = vmul.f32 %v504, %v610
    %v617 = vmul.f32 %v508, %v610
    %v618 = vmul.f32 %v512, %v610
    %v619 = vmul.f32 %v516, %v610
    %v620 = vmul.f32 %v520, %v610
    %v621 = vmul.f32 %v524, %v610
    %v622 = vmul.f32 %v528, %v610
    %v623 = vmul.f32 %v532, %v610
    %v624 = vmul.f32 %v536, %v610
    %v625 = vmul.f32 %v540, %v610
    %v626 = vmul.f32 %v544, %v610
    %v627 = vmul.f32 %v548, %v610
    %v628 = vmul.f32 %v552, %v610
    %v629 = vmul.f32 %v556, %v610
    %v630 = vmul.f32 %v560, %v610
    %v631 = vmul.f32 %v564, %v610
    %v632 = vmul.f32 %v568, %v610
    %v633 = vmul.f32 %v572, %v610
    %v634 = vmul.f32 %v576, %v610
    %v635 = vmul.f32 %v580, %v610
    %v636 = vmul.f32 %v584, %v610
    %v637 = vmul.f32 %v588, %v610
    %v638 = vmul.f32 %v592, %v610
    %v639 = vmul.f32 %v596, %v610
    %v640 = vmul.f32 %v600, %v610
    %v641 = vmul.f32 %v604, %v610
    %v642 = vmul.f32 %v608, %v610
    %v643 = vadd.f32 %v450, %v611
    %v644 = vadd.f32 %v451, %v612
    %v645 = vadd.f32 %v452, %v613
    %v646 = vadd.f32 %v453, %v614
    %v647 = vadd.f32 %v454, %v615
    %v648 = vadd.f32 %v455, %v616
    %v649 = vadd.f32 %v456, %v617
    %v650 = vadd.f32 %v457, %v618
    %v651 = vadd.f32 %v458, %v619
    %v652 = vadd.f32 %v459, %v620
    %v653 = vadd.f32 %v460, %v621
    %v654 = vadd.f32 %v461, %v622
    %v655 = vadd.f32 %v462, %v623
    %v656 = vadd.f32 %v463, %v624
    %v657 = vadd.f32 %v464, %v625
    %v658 = vadd.f32 %v465, %v626
    %v659 = vadd.f32 %v466, %v627
    %v660 = vadd.f32 %v467, %v628
    %v661 = vadd.f32 %v468, %v629
    %v662 = vadd.f32 %v469, %v630
    %v663 = vadd.f32 %v470, %v631
    %v664 = vadd.f32 %v471, %v632
    %v665 = vadd.f32 %v472, %v633
    %v666 = vadd.f32 %v473, %v634
    %v667 = vadd.f32 %v474, %v635
    %v668 = vadd.f32 %v475, %v636
    %v669 = vadd.f32 %v476, %v637
    %v670 = vadd.f32 %v477, %v638
    %v671 = vadd.f32 %v478, %v639
    %v672 = vadd.f32 %v479, %v640
    %v673 = vadd.f32 %v480, %v641
    %v674 = vadd.f32 %v481, %v642
    %v675 = vmax.f32 %v643, 0.0
    %v676 = vmax.f32 %v644, 0.0
    %v677 = vmax.f32 %v645, 0.0
    %v678 = vmax.f32 %v646, 0.0
    %v679 = vmax.f32 %v647, 0.0
    %v680 = vmax.f32 %v648, 0.0
    %v681 = vmax.f32 %v649, 0.0
    %v682 = vmax.f32 %v650, 0.0
    %v683 = vmax.f32 %v651, 0.0
    %v684 = vmax.f32 %v652, 0.0
    %v685 = vmax.f32 %v653, 0.0
    %v686 = vmax.f32 %v654, 0.0
    %v687 = vmax.f32 %v655, 0.0
    %v688 = vmax.f32 %v656, 0.0
    %v689 = vmax.f32 %v657, 0.0
    %v690 = vmax.f32 %v658, 0.0
    %v691 = vmax.f32 %v659, 0.0
    %v692 = vmax.f32 %v660, 0.0
    %v693 = vmax.f32 %v661, 0.0
    %v694 = vmax.f32 %v662, 0.0
    %v695 = vmax.f32 %v663, 0.0
    %v696 = vmax.f32 %v664, 0.0
    %v697 = vmax.f32 %v665, 0.0
    %v698 = vmax.f32 %v666, 0.0
    %v699 = vmax.f32 %v667, 0.0
    %v700 = vmax.f32 %v668, 0.0
    %v701 = vmax.f32 %v669, 0.0
    %v702 = vmax.f32 %v670, 0.0
    %v703 = vmax.f32 %v671, 0.0
    %v704 = vmax.f32 %v672, 0.0
    %v705 = vmax.f32 %v673, 0.0
    %v706 = vmax.f32 %v674, 0.0
    %v707 = vld [vmem:[%s3] sm:$0xff]
    %v708 = vld [vmem:[%s3 + $0x8] sm:$0xff]
    %v709 = vld [vmem:[%s3 + $0x10] sm:$0xff]
    %v710 = vld [vmem:[%s3 + $0x18] sm:$0xff]
    %v711 = vld [vmem:[%s3 + $0x20] sm:$0xff]
    %v712 = vld [vmem:[%s3 + $0x28] sm:$0xff]
    %v713 = vld [vmem:[%s3 + $0x30] sm:$0xff]
    %v714 = vld [vmem:[%s3 + $0x38] sm:$0xff]
    %v715 = vld [vmem:[%s4] sm:$0x1]
    %v717 = vperm.slane %v715, 0
    %vm719 = vcmask 523264
    %v721 = vsel %vm719, %v675, 0
    %v724 = vsel %vm719, %v676, 0
    %v727 = vsel %vm719, %v677, 0
    %v730 = vsel %vm719, %v678, 0
    %v733 = vsel %vm719, %v679, 0
    %v736 = vsel %vm719, %v680, 0
    %v739 = vsel %vm719, %v681, 0
    %v742 = vsel %vm719, %v682, 0
    %v745 = vsel %vm719, %v683, 0
    %v748 = vsel %vm719, %v684, 0
    %v751 = vsel %vm719, %v685, 0
    %v754 = vsel %vm719, %v686, 0
    %v757 = vsel %vm719, %v687, 0
    %v760 = vsel %vm719, %v688, 0
    %v763 = vsel %vm719, %v689, 0
    %v766 = vsel %vm719, %v690, 0
    %v769 = vsel %vm719, %v691, 0
    %v772 = vsel %vm719, %v692, 0
    %v775 = vsel %vm719, %v693, 0
    %v778 = vsel %vm719, %v694, 0
    %v781 = vsel %vm719, %v695, 0
    %v784 = vsel %vm719, %v696, 0
    %v787 = vsel %vm719, %v697, 0
    %v790 = vsel %vm719, %v698, 0
    %v793 = vsel %vm719, %v699, 0
    %v796 = vsel %vm719, %v700, 0
    %v799 = vsel %vm719, %v701, 0
    %v802 = vsel %vm719, %v702, 0
    %v805 = vsel %vm719, %v703, 0
    %v808 = vsel %vm719, %v704, 0
    %v811 = vsel %vm719, %v705, 0
    %v814 = vsel %vm719, %v706, 0
    %816 = vmatpush.msra.mxu0 0.0
    %817 = vmatpush.msra.mxu0 0.0
    %818 = vmatpush.msra.mxu0 0.0
    %819 = vmatpush.msra.mxu0 0.0
    %820 = vmatpush.msra.mxu0 0.0
    %821 = vmatpush.msra.mxu0 0.0
    %822 = vmatpush.msra.mxu0 0.0
    %823 = vmatpush.msra.mxu0 0.0
    %824 = vmatpush.msra.mxu0 %v714
    %825 = vmatpush.msra.mxu0 %v713
    %826 = vmatpush.msra.mxu0 %v712
    %827 = vmatpush.msra.mxu0 %v711
    %828 = vmatpush.msra.mxu0 %v710
    %829 = vmatpush.msra.mxu0 %v709
    %830 = vmatpush.msra.mxu0 %v708
    %831 = vmatpush.msra.mxu0 %v707
    %832 = vmatmul.f32.gmra.mxu0 %v721
    %v833 = vpop.f32.mrf.mxu0
    %v834 = vadd.f32 %v717, %v833
    %835 = vmatmul.f32.gmra.mxu0 %v724
    %v836 = vpop.f32.mrf.mxu0
    %v837 = vadd.f32 %v717, %v836
    %838 = vmatmul.f32.gmra.mxu0 %v727
    %v839 = vpop.f32.mrf.mxu0
    %v840 = vadd.f32 %v717, %v839
    %841 = vmatmul.f32.gmra.mxu0 %v730
    %v842 = vpop.f32.mrf.mxu0
    %v843 = vadd.f32 %v717, %v842
    %844 = vmatmul.f32.gmra.mxu0 %v733
    %v845 = vpop.f32.mrf.mxu0
    %v846 = vadd.f32 %v717, %v845
    %847 = vmatmul.f32.gmra.mxu0 %v736
    %v848 = vpop.f32.mrf.mxu0
    %v849 = vadd.f32 %v717, %v848
    %850 = vmatmul.f32.gmra.mxu0 %v739
    %v851 = vpop.f32.mrf.mxu0
    %v852 = vadd.f32 %v717, %v851
    %853 = vmatmul.f32.gmra.mxu0 %v742
    %v854 = vpop.f32.mrf.mxu0
    %v855 = vadd.f32 %v717, %v854
    %856 = vmatmul.f32.gmra.mxu0 %v745
    %v857 = vpop.f32.mrf.mxu0
    %v858 = vadd.f32 %v717, %v857
    %859 = vmatmul.f32.gmra.mxu0 %v748
    %v860 = vpop.f32.mrf.mxu0
    %v861 = vadd.f32 %v717, %v860
    %862 = vmatmul.f32.gmra.mxu0 %v751
    %v863 = vpop.f32.mrf.mxu0
    %v864 = vadd.f32 %v717, %v863
    %865 = vmatmul.f32.gmra.mxu0 %v754
    %v866 = vpop.f32.mrf.mxu0
    %v867 = vadd.f32 %v717, %v866
    %868 = vmatmul.f32.gmra.mxu0 %v757
    %v869 = vpop.f32.mrf.mxu0
    %v870 = vadd.f32 %v717, %v869
    %871 = vmatmul.f32.gmra.mxu0 %v760
    %v872 = vpop.f32.mrf.mxu0
    %v873 = vadd.f32 %v717, %v872
    %874 = vmatmul.f32.gmra.mxu0 %v763
    %v875 = vpop.f32.mrf.mxu0
    %v876 = vadd.f32 %v717, %v875
    %877 = vmatmul.f32.gmra.mxu0 %v766
    %v878 = vpop.f32.mrf.mxu0
    %v879 = vadd.f32 %v717, %v878
    %880 = vmatmul.f32.gmra.mxu0 %v769
    %v881 = vpop.f32.mrf.mxu0
    %v882 = vadd.f32 %v717, %v881
    %883 = vmatmul.f32.gmra.mxu0 %v772
    %v884 = vpop.f32.mrf.mxu0
    %v885 = vadd.f32 %v717, %v884
    %886 = vmatmul.f32.gmra.mxu0 %v775
    %v887 = vpop.f32.mrf.mxu0
    %v888 = vadd.f32 %v717, %v887
    %889 = vmatmul.f32.gmra.mxu0 %v778
    %v890 = vpop.f32.mrf.mxu0
    %v891 = vadd.f32 %v717, %v890
    %892 = vmatmul.f32.gmra.mxu0 %v781
    %v893 = vpop.f32.mrf.mxu0
    %v894 = vadd.f32 %v717, %v893
    %895 = vmatmul.f32.gmra.mxu0 %v784
    %v896 = vpop.f32.mrf.mxu0
    %v897 = vadd.f32 %v717, %v896
    %898 = vmatmul.f32.gmra.mxu0 %v787
    %v899 = vpop.f32.mrf.mxu0
    %v900 = vadd.f32 %v717, %v899
    %901 = vmatmul.f32.gmra.mxu0 %v790
    %v902 = vpop.f32.mrf.mxu0
    %v903 = vadd.f32 %v717, %v902
    %904 = vmatmul.f32.gmra.mxu0 %v793
    %v905 = vpop.f32.mrf.mxu0
    %v906 = vadd.f32 %v717, %v905
    %907 = vmatmul.f32.gmra.mxu0 %v796
    %v908 = vpop.f32.mrf.mxu0
    %v909 = vadd.f32 %v717, %v908
    %910 = vmatmul.f32.gmra.mxu0 %v799
    %v911 = vpop.f32.mrf.mxu0
    %v912 = vadd.f32 %v717, %v911
    %913 = vmatmul.f32.gmra.mxu0 %v802
    %v914 = vpop.f32.mrf.mxu0
    %v915 = vadd.f32 %v717, %v914
    %916 = vmatmul.f32.gmra.mxu0 %v805
    %v917 = vpop.f32.mrf.mxu0
    %v918 = vadd.f32 %v717, %v917
    %919 = vmatmul.f32.gmra.mxu0 %v808
    %v920 = vpop.f32.mrf.mxu0
    %v921 = vadd.f32 %v717, %v920
    %922 = vmatmul.f32.gmra.mxu0 %v811
    %v923 = vpop.f32.mrf.mxu0
    %v924 = vadd.f32 %v717, %v923
    %925 = vmatmul.f32.gmra.mxu0 %v814
    %v926 = vpop.f32.mrf.mxu0
    %v927 = vadd.f32 %v717, %v926
    %928 = vdwg.mxu0
    %v929 = vmax.f32 %v834, 0.0
    %v930 = vmax.f32 %v837, 0.0
    %v931 = vmax.f32 %v840, 0.0
    %v932 = vmax.f32 %v843, 0.0
    %v933 = vmax.f32 %v846, 0.0
    %v934 = vmax.f32 %v849, 0.0
    %v935 = vmax.f32 %v852, 0.0
    %v936 = vmax.f32 %v855, 0.0
    %v937 = vmax.f32 %v858, 0.0
    %v938 = vmax.f32 %v861, 0.0
    %v939 = vmax.f32 %v864, 0.0
    %v940 = vmax.f32 %v867, 0.0
    %v941 = vmax.f32 %v870, 0.0
    %v942 = vmax.f32 %v873, 0.0
    %v943 = vmax.f32 %v876, 0.0
    %v944 = vmax.f32 %v879, 0.0
    %v945 = vmax.f32 %v882, 0.0
    %v946 = vmax.f32 %v885, 0.0
    %v947 = vmax.f32 %v888, 0.0
    %v948 = vmax.f32 %v891, 0.0
    %v949 = vmax.f32 %v894, 0.0
    %v950 = vmax.f32 %v897, 0.0
    %v951 = vmax.f32 %v900, 0.0
    %v952 = vmax.f32 %v903, 0.0
    %v953 = vmax.f32 %v906, 0.0
    %v954 = vmax.f32 %v909, 0.0
    %v955 = vmax.f32 %v912, 0.0
    %v956 = vmax.f32 %v915, 0.0
    %v957 = vmax.f32 %v918, 0.0
    %v958 = vmax.f32 %v921, 0.0
    %v959 = vmax.f32 %v924, 0.0
    %v960 = vmax.f32 %v927, 0.0
    %v961 = vld [vmem:[%s5] sm:$0xff]
    %v962 = vld [vmem:[%s5 + $0x8] sm:$0xff]
    %v963 = vld [vmem:[%s5 + $0x10] sm:$0xff]
    %v964 = vld [vmem:[%s5 + $0x18] sm:$0xff]
    %v965 = vld [vmem:[%s6] sm:$0x1]
    %v967 = vperm.slane %v965, 0
    %vm969 = vcmask 261120
    %v971 = vsel %vm969, %v929, 0
    %v974 = vsel %vm969, %v930, 0
    %v977 = vsel %vm969, %v931, 0
    %v980 = vsel %vm969, %v932, 0
    %v983 = vsel %vm969, %v933, 0
    %v986 = vsel %vm969, %v934, 0
    %v989 = vsel %vm969, %v935, 0
    %v992 = vsel %vm969, %v936, 0
    %v995 = vsel %vm969, %v937, 0
    %v998 = vsel %vm969, %v938, 0
    %v1001 = vsel %vm969, %v939, 0
    %v1004 = vsel %vm969, %v940, 0
    %v1007 = vsel %vm969, %v941, 0
    %v1010 = vsel %vm969, %v942, 0
    %v1013 = vsel %vm969, %v943, 0
    %v1016 = vsel %vm969, %v944, 0
    %v1019 = vsel %vm969, %v945, 0
    %v1022 = vsel %vm969, %v946, 0
    %v1025 = vsel %vm969, %v947, 0
    %v1028 = vsel %vm969, %v948, 0
    %v1031 = vsel %vm969, %v949, 0
    %v1034 = vsel %vm969, %v950, 0
    %v1037 = vsel %vm969, %v951, 0
    %v1040 = vsel %vm969, %v952, 0
    %v1043 = vsel %vm969, %v953, 0
    %v1046 = vsel %vm969, %v954, 0
    %v1049 = vsel %vm969, %v955, 0
    %v1052 = vsel %vm969, %v956, 0
    %v1055 = vsel %vm969, %v957, 0
    %v1058 = vsel %vm969, %v958, 0
    %v1061 = vsel %vm969, %v959, 0
    %v1064 = vsel %vm969, %v960, 0
    %1066 = vmatpush.msra.mxu0 0.0
    %1067 = vmatpush.msra.mxu0 0.0
    %1068 = vmatpush.msra.mxu0 0.0
    %1069 = vmatpush.msra.mxu0 0.0
    %1070 = vmatpush.msra.mxu0 0.0
    %1071 = vmatpush.msra.mxu0 0.0
    %1072 = vmatpush.msra.mxu0 0.0
    %1073 = vmatpush.msra.mxu0 0.0
    %1074 = vmatpush.msra.mxu0 0.0
    %1075 = vmatpush.msra.mxu0 0.0
    %1076 = vmatpush.msra.mxu0 0.0
    %1077 = vmatpush.msra.mxu0 0.0
    %1078 = vmatpush.msra.mxu0 %v964
    %1079 = vmatpush.msra.mxu0 %v963
    %1080 = vmatpush.msra.mxu0 %v962
    %1081 = vmatpush.msra.mxu0 %v961
    %1082 = vmatmul.f32.gmra.mxu0 %v971
    %v1083 = vpop.f32.mrf.mxu0
    %v1084 = vadd.f32 %v967, %v1083
    %1085 = vmatmul.f32.gmra.mxu0 %v974
    %v1086 = vpop.f32.mrf.mxu0
    %v1087 = vadd.f32 %v967, %v1086
    %1088 = vmatmul.f32.gmra.mxu0 %v977
    %v1089 = vpop.f32.mrf.mxu0
    %v1090 = vadd.f32 %v967, %v1089
    %1091 = vmatmul.f32.gmra.mxu0 %v980
    %v1092 = vpop.f32.mrf.mxu0
    %v1093 = vadd.f32 %v967, %v1092
    %1094 = vmatmul.f32.gmra.mxu0 %v983
    %v1095 = vpop.f32.mrf.mxu0
    %v1096 = vadd.f32 %v967, %v1095
    %1097 = vmatmul.f32.gmra.mxu0 %v986
    %v1098 = vpop.f32.mrf.mxu0
    %v1099 = vadd.f32 %v967, %v1098
    %1100 = vmatmul.f32.gmra.mxu0 %v989
    %v1101 = vpop.f32.mrf.mxu0
    %v1102 = vadd.f32 %v967, %v1101
    %1103 = vmatmul.f32.gmra.mxu0 %v992
    %v1104 = vpop.f32.mrf.mxu0
    %v1105 = vadd.f32 %v967, %v1104
    %1106 = vmatmul.f32.gmra.mxu0 %v995
    %v1107 = vpop.f32.mrf.mxu0
    %v1108 = vadd.f32 %v967, %v1107
    %1109 = vmatmul.f32.gmra.mxu0 %v998
    %v1110 = vpop.f32.mrf.mxu0
    %v1111 = vadd.f32 %v967, %v1110
    %1112 = vmatmul.f32.gmra.mxu0 %v1001
    %v1113 = vpop.f32.mrf.mxu0
    %v1114 = vadd.f32 %v967, %v1113
    %1115 = vmatmul.f32.gmra.mxu0 %v1004
    %v1116 = vpop.f32.mrf.mxu0
    %v1117 = vadd.f32 %v967, %v1116
    %1118 = vmatmul.f32.gmra.mxu0 %v1007
    %v1119 = vpop.f32.mrf.mxu0
    %v1120 = vadd.f32 %v967, %v1119
    %1121 = vmatmul.f32.gmra.mxu0 %v1010
    %v1122 = vpop.f32.mrf.mxu0
    %v1123 = vadd.f32 %v967, %v1122
    %1124 = vmatmul.f32.gmra.mxu0 %v1013
    %v1125 = vpop.f32.mrf.mxu0
    %v1126 = vadd.f32 %v967, %v1125
    %1127 = vmatmul.f32.gmra.mxu0 %v1016
    %v1128 = vpop.f32.mrf.mxu0
    %v1129 = vadd.f32 %v967, %v1128
    %1130 = vmatmul.f32.gmra.mxu0 %v1019
    %v1131 = vpop.f32.mrf.mxu0
    %v1132 = vadd.f32 %v967, %v1131
    %1133 = vmatmul.f32.gmra.mxu0 %v1022
    %v1134 = vpop.f32.mrf.mxu0
    %v1135 = vadd.f32 %v967, %v1134
    %1136 = vmatmul.f32.gmra.mxu0 %v1025
    %v1137 = vpop.f32.mrf.mxu0
    %v1138 = vadd.f32 %v967, %v1137
    %1139 = vmatmul.f32.gmra.mxu0 %v1028
    %v1140 = vpop.f32.mrf.mxu0
    %v1141 = vadd.f32 %v967, %v1140
    %1142 = vmatmul.f32.gmra.mxu0 %v1031
    %v1143 = vpop.f32.mrf.mxu0
    %v1144 = vadd.f32 %v967, %v1143
    %1145 = vmatmul.f32.gmra.mxu0 %v1034
    %v1146 = vpop.f32.mrf.mxu0
    %v1147 = vadd.f32 %v967, %v1146
    %1148 = vmatmul.f32.gmra.mxu0 %v1037
    %v1149 = vpop.f32.mrf.mxu0
    %v1150 = vadd.f32 %v967, %v1149
    %1151 = vmatmul.f32.gmra.mxu0 %v1040
    %v1152 = vpop.f32.mrf.mxu0
    %v1153 = vadd.f32 %v967, %v1152
    %1154 = vmatmul.f32.gmra.mxu0 %v1043
    %v1155 = vpop.f32.mrf.mxu0
    %v1156 = vadd.f32 %v967, %v1155
    %1157 = vmatmul.f32.gmra.mxu0 %v1046
    %v1158 = vpop.f32.mrf.mxu0
    %v1159 = vadd.f32 %v967, %v1158
    %1160 = vmatmul.f32.gmra.mxu0 %v1049
    %v1161 = vpop.f32.mrf.mxu0
    %v1162 = vadd.f32 %v967, %v1161
    %1163 = vmatmul.f32.gmra.mxu0 %v1052
    %v1164 = vpop.f32.mrf.mxu0
    %v1165 = vadd.f32 %v967, %v1164
    %1166 = vmatmul.f32.gmra.mxu0 %v1055
    %v1167 = vpop.f32.mrf.mxu0
    %v1168 = vadd.f32 %v967, %v1167
    %1169 = vmatmul.f32.gmra.mxu0 %v1058
    %v1170 = vpop.f32.mrf.mxu0
    %v1171 = vadd.f32 %v967, %v1170
    %1172 = vmatmul.f32.gmra.mxu0 %v1061
    %v1173 = vpop.f32.mrf.mxu0
    %v1174 = vadd.f32 %v967, %v1173
    %1175 = vmatmul.f32.gmra.mxu0 %v1064
    %v1176 = vpop.f32.mrf.mxu0
    %v1177 = vadd.f32 %v967, %v1176
    %1178 = vdwg.mxu0
    %1179 = vst [vmem:[#allocation2] sm:$0xff] %v1084
    %1180 = vst [vmem:[#allocation2 + $0x8] sm:$0xff] %v1087
    %1181 = vst [vmem:[#allocation2 + $0x10] sm:$0xff] %v1090
    %1182 = vst [vmem:[#allocation2 + $0x18] sm:$0xff] %v1093
    %1183 = vst [vmem:[#allocation2 + $0x20] sm:$0xff] %v1096
    %1184 = vst [vmem:[#allocation2 + $0x28] sm:$0xff] %v1099
    %1185 = vst [vmem:[#allocation2 + $0x30] sm:$0xff] %v1102
    %1186 = vst [vmem:[#allocation2 + $0x38] sm:$0xff] %v1105
    %1187 = vst [vmem:[#allocation2 + $0x40] sm:$0xff] %v1108
    %1188 = vst [vmem:[#allocation2 + $0x48] sm:$0xff] %v1111
    %1189 = vst [vmem:[#allocation2 + $0x50] sm:$0xff] %v1114
    %1190 = vst [vmem:[#allocation2 + $0x58] sm:$0xff] %v1117
    %1191 = vst [vmem:[#allocation2 + $0x60] sm:$0xff] %v1120
    %1192 = vst [vmem:[#allocation2 + $0x68] sm:$0xff] %v1123
    %1193 = vst [vmem:[#allocation2 + $0x70] sm:$0xff] %v1126
    %1194 = vst [vmem:[#allocation2 + $0x78] sm:$0xff] %v1129
    %1195 = vst [vmem:[#allocation2 + $0x80] sm:$0xff] %v1132
    %1196 = vst [vmem:[#allocation2 + $0x88] sm:$0xff] %v1135
    %1197 = vst [vmem:[#allocation2 + $0x90] sm:$0xff] %v1138
    %1198 = vst [vmem:[#allocation2 + $0x98] sm:$0xff] %v1141
    %1199 = vst [vmem:[#allocation2 + $0xa0] sm:$0xff] %v1144
    %1200 = vst [vmem:[#allocation2 + $0xa8] sm:$0xff] %v1147
    %1201 = vst [vmem:[#allocation2 + $0xb0] sm:$0xff] %v1150
    %1202 = vst [vmem:[#allocation2 + $0xb8] sm:$0xff] %v1153
    %1203 = vst [vmem:[#allocation2 + $0xc0] sm:$0xff] %v1156
    %1204 = vst [vmem:[#allocation2 + $0xc8] sm:$0xff] %v1159
    %1205 = vst [vmem:[#allocation2 + $0xd0] sm:$0xff] %v1162
    %1206 = vst [vmem:[#allocation2 + $0xd8] sm:$0xff] %v1165
    %1207 = vst [vmem:[#allocation2 + $0xe0] sm:$0xff] %v1168
    %1208 = vst [vmem:[#allocation2 + $0xe8] sm:$0xff] %v1171
    %1209 = vst [vmem:[#allocation2 + $0xf0] sm:$0xff] %v1174
    %1210 = vst [vmem:[#allocation2 + $0xf8] sm:$0xff] %v1177
    // Predicated region
    $region30: #{tpu_custom_call.1} parent=1 // pred_check
      _
    $region31: #{tpu_custom_call.1} parent=1 // pred_check_branch
      %1212 = sbr.rel (0) target = $region33
    $region32: #{tpu_custom_call.1} parent=1 // pred_region
      %1214 = vsyncadd [#allocation3], 0
      %s1215 = sshll.u32 [#allocation2], 4
      %s1216 = int_to_ptr.vmem [resolvable:$true] %s1215
      %s1217 = sshll.u32 %s7, 4
      %s1218 = int_to_ptr.hbm [resolvable:$true] %s1217
      %1223 = dma.vmem_to_hbm [thread:$0]  %s1216, 4096, %s1218, [#allocation3], 128, 128, 8
    $region33: #{tpu_custom_call.1} parent=1 // pred_fallthru
      _
    // Predicated region
    $region34: #{tpu_custom_call.1} parent=1 // pred_check
      _
    $region35: #{tpu_custom_call.1} parent=1 // pred_check_branch
      %1225 = sbr.rel (0) target = $region37
    $region36: #{tpu_custom_call.1} parent=1 // pred_region
      %1227 = dma.done [#allocation3], 4096
    $region37: #{tpu_custom_call.1} parent=1 // pred_fallthru
      _
    %1228 = vsyncpa [#allocation3], 1

</llo_original>
